<compile_context>
chip_gen: v6e
topology: v6e:2x2x1
jax: 0.10.0
libtpu: 0.0.40
codegen_flags: <defaults>
</compile_context>

<pallas_src>
import functools

import jax
import jax.numpy as jnp
from jax import lax
from jax.experimental import pallas as pl
from jax.experimental.pallas import tpu as pltpu

BN_EPS = 0.001
VAR_EPS = 1e-4


def _round_up(v, m):
    return (v + m - 1) // m * m


def _cdiv(a, b):
    return (a + b - 1) // b


def _encoder_kernel(n_out_p, k_tile,
                    x_ref, w1_ref, b1_ref, wh_ref, bh_ref, nz_ref,
                    qm_ref, qv_ref, z_ref, acc_ref):
    k = pl.program_id(1)

    @pl.when(k == 0)
    def _():
        acc_ref[...] = jnp.zeros_like(acc_ref)

    # First-layer matmul, streamed over the d_in reduction (bf16 in, f32 accumulate).
    # x streams tile-by-tile; w1 is resident in VMEM (fetched from HBM once), so we
    # just slice the rows belonging to this reduction step.
    k_off = pl.multiple_of(k * k_tile, 128)
    acc_ref[...] += jnp.dot(x_ref[...], w1_ref[pl.ds(k_off, k_tile), :],
                            preferred_element_type=jnp.float32)

    @pl.when(k == pl.num_programs(1) - 1)
    def _():
        # Eval-mode BatchNorm is pre-folded into w1 / b1; Dropout is a no-op in eval.
        h = jnp.maximum(acc_ref[...] + b1_ref[...], 0.0)
        # Fused mean|var head matmul (lane-dense: n_out padded to 128 lanes).
        head = jnp.dot(h.astype(jnp.bfloat16), wh_ref[...],
                       preferred_element_type=jnp.float32) + bh_ref[...]
        q_m = head[:, :n_out_p]
        q_v = jnp.exp(head[:, n_out_p:]) + VAR_EPS
        qm_ref[...] = q_m
        qv_ref[...] = q_v
        # Normal(q_m, sqrt(q_v)).rsample(); z_transformation = identity ('normal').
        z_ref[...] = q_m + jnp.sqrt(q_v) * nz_ref[...]


def encoder_forward(x, cat_idx, params, noise):
    """x: (B, n_input) f32, cat_idx: (B,) int32 in [0, n_cat), noise: (B, n_output) f32."""
    B, n_input = x.shape
    n_cat = params["n_cat"]
    n_cat_eff = n_cat if n_cat > 1 else 0        # FCLayers drops n_cat <= 1
    n_hidden = params["w1"].shape[1]
    n_out = params["wm"].shape[1]
    d_in = n_input + n_cat_eff

    # ---- fold eval-mode BatchNorm into the first linear (wrapper-side, f32) ----
    scale = params["bn_gamma"] * lax.rsqrt(params["bn_var"] + BN_EPS)
    w1f = params["w1"][:d_in] * scale[None, :]                     # (d_in, n_hidden)
    b1f = (params["b1"] - params["bn_mean"]) * scale + params["bn_beta"]

    # ---- padding / tiling ----
    # B tile multiple of 16 (bf16 sublane packing); K padded only to 128 (no inflation).
    B_TILE_MAX, K_TILE_MAX = 512, 2048
    B_tile = min(B_TILE_MAX, _round_up(B, 16))
    B_pad = _round_up(B, B_tile)
    K_pad0 = _round_up(d_in, 128)
    n_k = _cdiv(K_pad0, K_TILE_MAX)
    K_tile = _round_up(_cdiv(K_pad0, n_k), 128)
    K_pad = n_k * K_tile
    H_pad = _round_up(n_hidden, 128)
    n_out_p = _round_up(n_out, 128)

    # x with the one-hot categorical columns appended (== torch.cat([x, one_hot(cat)])).
    # They live inside the 128-lane K padding, so the cat covariate costs ~no extra DMA
    # and the old (B, n_hidden) f32 row-bias stream is eliminated entirely.
    x_p = jnp.zeros((B_pad, K_pad), jnp.bfloat16)
    x_p = x_p.at[:B, :n_input].set(x.astype(jnp.bfloat16))
    if n_cat_eff:
        one_hot = jax.nn.one_hot(cat_idx, n_cat_eff, dtype=jnp.bfloat16)
        x_p = x_p.at[:B, n_input:d_in].set(one_hot)

    w1_p = jnp.zeros((K_pad, H_pad), jnp.bfloat16).at[:d_in, :n_hidden].set(
        w1f.astype(jnp.bfloat16))
    b1_p = jnp.zeros((1, H_pad), jnp.float32).at[0, :n_hidden].set(b1f)
    # Fused mean|var head, padded to a lane-dense width.
    wh_p = jnp.zeros((H_pad, 2 * n_out_p), jnp.bfloat16)
    wh_p = wh_p.at[:n_hidden, :n_out].set(params["wm"].astype(jnp.bfloat16))
    wh_p = wh_p.at[:n_hidden, n_out_p:n_out_p + n_out].set(params["wv"].astype(jnp.bfloat16))
    bh_p = jnp.zeros((1, 2 * n_out_p), jnp.float32)
    bh_p = bh_p.at[0, :n_out].set(params["bm"]).at[0, n_out_p:n_out_p + n_out].set(params["bv"])
    nz_p = jnp.zeros((B_pad, n_out_p), jnp.float32).at[:B, :n_out].set(noise)

    grid = (B_pad // B_tile, n_k)
    out_sds = jax.ShapeDtypeStruct((B_pad, n_out_p), jnp.float32)

    # VMEM budget (worst-case double-buffering assumed everywhere) -> raise scoped limit.
    vmem_need = (2 * B_tile * K_tile * 2            # x (bf16, double-buffered)
                 + 2 * K_pad * H_pad * 2            # resident folded w1 (bf16)
                 + 2 * H_pad * (2 * n_out_p) * 2    # fused head weights (bf16)
                 + 2 * B_tile * n_out_p * 4         # rsample noise
                 + 3 * 2 * B_tile * n_out_p * 4     # three f32 outputs
                 + B_tile * H_pad * 4               # f32 accumulator scratch
                 + (1 << 20))                       # biases / headroom
    vmem_limit = int(min(max(vmem_need, 32 << 20), 60 << 20))  # stay under v7x 64 MiB/TC

    flops = 2 * B_pad * K_pad * H_pad + 2 * B_pad * H_pad * (2 * n_out_p)
    bytes_accessed = (2 * B_pad * K_pad                     # x (bf16)
                      + 2 * K_pad * H_pad                   # folded w1 (bf16), fetched once
                      + 2 * H_pad * (2 * n_out_p)           # fused head weights, once
                      + 4 * (H_pad + 2 * n_out_p)           # biases
                      + 4 * B_pad * n_out_p                 # rsample noise (f32)
                      + 3 * 4 * B_pad * n_out_p)            # three f32 outputs

    q_m, q_v, z = pl.pallas_call(
        functools.partial(_encoder_kernel, n_out_p, K_tile),
        out_shape=(out_sds, out_sds, out_sds),
        grid_spec=pltpu.PrefetchScalarGridSpec(
            num_scalar_prefetch=0,
            grid=grid,
            in_specs=[
                pl.BlockSpec((B_tile, K_tile), lambda i, k: (i, k)),       # x tile (streamed)
                pl.BlockSpec((K_pad, H_pad), lambda i, k: (0, 0)),         # folded w1 (resident)
                pl.BlockSpec((1, H_pad), lambda i, k: (0, 0)),             # folded bias (resident)
                pl.BlockSpec((H_pad, 2 * n_out_p), lambda i, k: (0, 0)),   # fused head weights
                pl.BlockSpec((1, 2 * n_out_p), lambda i, k: (0, 0)),       # fused head bias
                pl.BlockSpec((B_tile, n_out_p), lambda i, k: (i, 0)),      # rsample noise
            ],
            out_specs=(
                pl.BlockSpec((B_tile, n_out_p), lambda i, k: (i, 0)),
                pl.BlockSpec((B_tile, n_out_p), lambda i, k: (i, 0)),
                pl.BlockSpec((B_tile, n_out_p), lambda i, k: (i, 0)),
            ),
            scratch_shapes=[pltpu.VMEM((B_tile, H_pad), jnp.float32)],
        ),
        compiler_params=pltpu.CompilerParams(
            dimension_semantics=("parallel", "arbitrary"),
            vmem_limit_bytes=vmem_limit),
        cost_estimate=pl.CostEstimate(flops=flops,
                                      transcendentals=B_pad * n_out_p,
                                      bytes_accessed=bytes_accessed),
    )(x_p, w1_p, b1_p, wh_p, bh_p, nz_p)

    return q_m[:B, :n_out], q_v[:B, :n_out], z[:B, :n_out]


def init_params(key, n_input, n_hidden, n_output, n_cat):
    ks = jax.random.split(key, 6)
    d_in = n_input + n_cat
    s1 = 1.0 / jnp.sqrt(d_in)
    s2 = 1.0 / jnp.sqrt(n_hidden)
    return {
        "n_cat": n_cat,
        # FCLayers Layer 0 linear (weights stored (in, out) = torch W.T)
        "w1": jax.random.uniform(ks[0], (d_in, n_hidden), jnp.float32, -s1, s1),
        "b1": jax.random.uniform(ks[1], (n_hidden,), jnp.float32, -s1, s1),
        # BatchNorm1d(n_hidden) eval-mode affine params / running statistics
        "bn_gamma": jnp.full((n_hidden,), 1.05, jnp.float32),
        "bn_beta": jnp.full((n_hidden,), 0.02, jnp.float32),
        "bn_mean": jnp.full((n_hidden,), 0.01, jnp.float32),
        "bn_var": jnp.full((n_hidden,), 0.9, jnp.float32),
        # mean / var heads
        "wm": jax.random.uniform(ks[2], (n_hidden, n_output), jnp.float32, -s2, s2),
        "bm": jax.random.uniform(ks[3], (n_output,), jnp.float32, -s2, s2),
        "wv": jax.random.uniform(ks[4], (n_hidden, n_output), jnp.float32, -s2, s2),
        "bv": jax.random.uniform(ks[5], (n_output,), jnp.float32, -s2, s2),
    }


def _reference_module(x, cat_idx, params, noise):
    """Original eval-mode Encoder semantics (the PyTorch spec) in pure f32 JAX."""
    one_hot = jax.nn.one_hot(cat_idx, params["n_cat"], dtype=jnp.float32)
    xc = jnp.concatenate([x, one_hot], axis=-1)
    h = xc @ params["w1"] + params["b1"]
    h = (h - params["bn_mean"]) * lax.rsqrt(params["bn_var"] + BN_EPS) \
        * params["bn_gamma"] + params["bn_beta"]
    h = jnp.maximum(h, 0.0)                      # ReLU; Dropout is a no-op in eval
    q_m = h @ params["wm"] + params["bm"]
    q_v = jnp.exp(h @ params["wv"] + params["bv"]) + VAR_EPS
    z = q_m + jnp.sqrt(q_v) * noise
    return q_m, q_v, z


def _reference_kernel_math(x, cat_idx, params, noise):
    """Same semantics, mirroring the kernel's numeric path (BN fold + bf16 streaming)."""
    scale = params["bn_gamma"] * lax.rsqrt(params["bn_var"] + BN_EPS)
    w1f = params["w1"] * scale[None, :]
    b1f = (params["b1"] - params["bn_mean"]) * scale + params["bn_beta"]
    one_hot = jax.nn.one_hot(cat_idx, params["n_cat"], dtype=jnp.float32)
    xc = jnp.concatenate([x, one_hot], axis=-1).astype(jnp.bfloat16)
    acc = jnp.dot(xc, w1f.astype(jnp.bfloat16), preferred_element_type=jnp.float32)
    h = jnp.maximum(acc + b1f[None, :], 0.0)
    hb = h.astype(jnp.bfloat16)
    q_m = jnp.dot(hb, params["wm"].astype(jnp.bfloat16),
                  preferred_element_type=jnp.float32) + params["bm"]
    q_v = jnp.exp(jnp.dot(hb, params["wv"].astype(jnp.bfloat16),
                          preferred_element_type=jnp.float32) + params["bv"]) + VAR_EPS
    z = q_m + jnp.sqrt(q_v) * noise
    return q_m, q_v, z


if __name__ == "__main__":
    B, n_input, n_hidden, n_output, n_cat = 8, 32, 128, 16, 3

    key = jax.random.PRNGKey(0)
    k_x, k_cat, k_noise, k_par = jax.random.split(key, 4)

    x = jax.random.normal(k_x, (B, n_input), jnp.float32)
    cat_idx = jax.random.randint(k_cat, (B,), 0, n_cat, jnp.int32)
    noise = jax.random.normal(k_noise, (B, n_output), jnp.float32)  # eps for rsample
    params = init_params(k_par, n_input, n_hidden, n_output, n_cat)

    q_m, q_v, latent = encoder_forward(x, cat_idx, params, noise)
    jax.block_until_ready((q_m, q_v, latent))

    # Tight check: kernel vs the identical numeric path in pure JAX.
    tm, tv, tz = _reference_kernel_math(x, cat_idx, params, noise)
    assert jnp.allclose(q_m, tm, atol=1e-3, rtol=1e-3)
    assert jnp.allclose(q_v, tv, atol=1e-3, rtol=1e-3)
    assert jnp.allclose(latent, tz, atol=1e-3, rtol=1e-3)

    # Semantic check: kernel vs the original eval-mode module math in f32
    # (loose tolerance only because of the intentional bf16 MXU streaming).
    rm, rv, rz = _reference_module(x, cat_idx, params, noise)
    assert jnp.allclose(q_m, rm, atol=5e-2, rtol=5e-2)
    assert jnp.allclose(q_v, rv, atol=5e-2, rtol=5e-2)
    assert jnp.allclose(latent, rz, atol=5e-2, rtol=5e-2)

    print("KERNEL_OK")
</pallas_src>

<mosaic_0001>
module attributes {stable_mosaic.version = 11 : i64} {
  func.func @_encoder_kernel(%arg0: i32, %arg1: i32, %arg2: memref<16x128xbf16, #tpu.memory_space<vmem>>, %arg3: memref<128x128xbf16, #tpu.memory_space<vmem>>, %arg4: memref<1x128xf32, #tpu.memory_space<vmem>>, %arg5: memref<128x256xbf16, #tpu.memory_space<vmem>>, %arg6: memref<1x256xf32, #tpu.memory_space<vmem>>, %arg7: memref<16x128xf32, #tpu.memory_space<vmem>>, %arg8: memref<16x128xf32, #tpu.memory_space<vmem>>, %arg9: memref<16x128xf32, #tpu.memory_space<vmem>>, %arg10: memref<16x128xf32, #tpu.memory_space<vmem>>, %arg11: memref<16x128xf32, #tpu.memory_space<vmem>>) attributes {dimension_semantics = [#tpu.dimension_semantics<parallel>, #tpu.dimension_semantics<arbitrary>], iteration_bounds = array<i64: 1, 1>, scalar_prefetch = 0 : i64, scratch_operands = 1 : i64, tpu.core_type = #tpu.core_type<tc>, window_params = [{transform_indices = @transform_0, window_bounds = array<i64: 16, 128>}, {pipeline_mode = #tpu.pipeline_mode<synchronous>, transform_indices = @transform_1, window_bounds = array<i64: 128, 128>}, {pipeline_mode = #tpu.pipeline_mode<synchronous>, transform_indices = @transform_2, window_bounds = array<i64: 1, 128>}, {pipeline_mode = #tpu.pipeline_mode<synchronous>, transform_indices = @transform_3, window_bounds = array<i64: 128, 256>}, {pipeline_mode = #tpu.pipeline_mode<synchronous>, transform_indices = @transform_4, window_bounds = array<i64: 1, 256>}, {transform_indices = @transform_5, window_bounds = array<i64: 16, 128>}, {transform_indices = @transform_6, window_bounds = array<i64: 16, 128>}, {transform_indices = @transform_7, window_bounds = array<i64: 16, 128>}, {transform_indices = @transform_8, window_bounds = array<i64: 16, 128>}]} {
    %c0_i32 = arith.constant 0 : i32
    %0 = arith.cmpi eq, %arg1, %c0_i32 : i32
    %1 = arith.extui %0 : i1 to i32
    %c0_i32_0 = arith.constant 0 : i32
    %2 = arith.cmpi ne, %1, %c0_i32_0 : i32
    scf.if %2 {
      %cst_9 = arith.constant 0.000000e+00 : f32
      %15 = vector.broadcast %cst_9 : f32 to vector<16x128xf32>
      %c0_10 = arith.constant 0 : index
      %c0_11 = arith.constant 0 : index
      %16 = vector.load %arg11[%c0_10, %c0_11] : memref<16x128xf32, #tpu.memory_space<vmem>>, vector<16x128xf32>
      tpu.vector_store %arg11[%c0_10, %c0_11], %15 {strides = array<i32>} : memref<16x128xf32, #tpu.memory_space<vmem>>, vector<16x128xf32>,
    } else {
    }
    %c128_i32 = arith.constant 128 : i32
    %3 = arith.muli %arg1, %c128_i32 : i32
    %4 = tpu.assume_multiple %3, 128 : i32
    %c0 = arith.constant 0 : index
    %c0_1 = arith.constant 0 : index
    %5 = vector.load %arg11[%c0, %c0_1] : memref<16x128xf32, #tpu.memory_space<vmem>>, vector<16x128xf32>
    %c0_2 = arith.constant 0 : index
    %c0_3 = arith.constant 0 : index
    %6 = vector.load %arg2[%c0_2, %c0_3] : memref<16x128xbf16, #tpu.memory_space<vmem>>, vector<16x128xbf16>
    %7 = arith.index_cast %4 : i32 to index
    %c0_4 = arith.constant 0 : index
    %8 = vector.load %arg3[%7, %c0_4] : memref<128x128xbf16, #tpu.memory_space<vmem>>, vector<128x128xbf16>
    %cst = arith.constant dense<0.000000e+00> : vector<16x128xf32>
    %9 = tpu.matmul %6, %8, %cst {dimension_numbers = #tpu.dot_dimension_numbers<[1], [0], [0], [1], [0, 0, 1, 1], [], []>} : vector<16x128xbf16>, vector<128x128xbf16>, vector<16x128xf32> -> vector<16x128xf32>
    %10 = arith.addf %5, %9 : vector<16x128xf32>
    %c0_5 = arith.constant 0 : index
    %c0_6 = arith.constant 0 : index
    %11 = vector.load %arg11[%c0_5, %c0_6] : memref<16x128xf32, #tpu.memory_space<vmem>>, vector<16x128xf32>
    tpu.vector_store %arg11[%c0_5, %c0_6], %10 {strides = array<i32>} : memref<16x128xf32, #tpu.memory_space<vmem>>, vector<16x128xf32>,
    %c0_i32_7 = arith.constant 0 : i32
    %12 = arith.cmpi eq, %arg1, %c0_i32_7 : i32
    %13 = arith.extui %12 : i1 to i32
    %c0_i32_8 = arith.constant 0 : i32
    %14 = arith.cmpi ne, %13, %c0_i32_8 : i32
    scf.if %14 {
      %c0_9 = arith.constant 0 : index
      %c0_10 = arith.constant 0 : index
      %15 = vector.load %arg11[%c0_9, %c0_10] : memref<16x128xf32, #tpu.memory_space<vmem>>, vector<16x128xf32>
      %c0_11 = arith.constant 0 : index
      %c0_12 = arith.constant 0 : index
      %16 = vector.load %arg4[%c0_11, %c0_12] : memref<1x128xf32, #tpu.memory_space<vmem>>, vector<1x128xf32>
      %17 = vector.broadcast %16 : vector<1x128xf32> to vector<16x128xf32>
      %18 = arith.addf %15, %17 : vector<16x128xf32>
      %cst_13 = arith.constant 0.000000e+00 : f32
      %19 = vector.broadcast %cst_13 : f32 to vector<16x128xf32>
      %20 = arith.maximumf %18, %19 : vector<16x128xf32>
      %21 = arith.truncf %20 : vector<16x128xf32> to vector<16x128xbf16>
      %c0_14 = arith.constant 0 : index
      %c0_15 = arith.constant 0 : index
      %22 = vector.load %arg5[%c0_14, %c0_15] : memref<128x256xbf16, #tpu.memory_space<vmem>>, vector<128x256xbf16>
      %cst_16 = arith.constant dense<0.000000e+00> : vector<16x256xf32>
      %23 = tpu.matmul %21, %22, %cst_16 {dimension_numbers = #tpu.dot_dimension_numbers<[1], [0], [0], [1], [0, 0, 1, 1], [], []>} : vector<16x128xbf16>, vector<128x256xbf16>, vector<16x256xf32> -> vector<16x256xf32>
      %c0_17 = arith.constant 0 : index
      %c0_18 = arith.constant 0 : index
      %24 = vector.load %arg6[%c0_17, %c0_18] : memref<1x256xf32, #tpu.memory_space<vmem>>, vector<1x256xf32>
      %25 = vector.broadcast %24 : vector<1x256xf32> to vector<16x256xf32>
      %26 = arith.addf %23, %25 : vector<16x256xf32>
      %27 = vector.extract_strided_slice %26 {offsets = [0, 0], sizes = [16, 128], strides = [1, 1]} : vector<16x256xf32> to vector<16x128xf32>
      %28 = vector.extract_strided_slice %26 {offsets = [0, 128], sizes = [16, 128], strides = [1, 1]} : vector<16x256xf32> to vector<16x128xf32>
      %29 = math.exp %28 : vector<16x128xf32>
      %cst_19 = arith.constant 9.99999974E-5 : f32
      %30 = vector.broadcast %cst_19 : f32 to vector<16x128xf32>
      %31 = arith.addf %29, %30 : vector<16x128xf32>
      %c0_20 = arith.constant 0 : index
      %c0_21 = arith.constant 0 : index
      %32 = vector.load %arg8[%c0_20, %c0_21] : memref<16x128xf32, #tpu.memory_space<vmem>>, vector<16x128xf32>
      tpu.vector_store %arg8[%c0_20, %c0_21], %27 {strides = array<i32>} : memref<16x128xf32, #tpu.memory_space<vmem>>, vector<16x128xf32>,
      %c0_22 = arith.constant 0 : index
      %c0_23 = arith.constant 0 : index
      %33 = vector.load %arg9[%c0_22, %c0_23] : memref<16x128xf32, #tpu.memory_space<vmem>>, vector<16x128xf32>
      tpu.vector_store %arg9[%c0_22, %c0_23], %31 {strides = array<i32>} : memref<16x128xf32, #tpu.memory_space<vmem>>, vector<16x128xf32>,
      %34 = math.sqrt %31 : vector<16x128xf32>
      %c0_24 = arith.constant 0 : index
      %c0_25 = arith.constant 0 : index
      %35 = vector.load %arg7[%c0_24, %c0_25] : memref<16x128xf32, #tpu.memory_space<vmem>>, vector<16x128xf32>
      %36 = arith.mulf %34, %35 : vector<16x128xf32>
      %37 = arith.addf %27, %36 : vector<16x128xf32>
      %c0_26 = arith.constant 0 : index
      %c0_27 = arith.constant 0 : index
      %38 = vector.load %arg10[%c0_26, %c0_27] : memref<16x128xf32, #tpu.memory_space<vmem>>, vector<16x128xf32>
      tpu.vector_store %arg10[%c0_26, %c0_27], %37 {strides = array<i32>} : memref<16x128xf32, #tpu.memory_space<vmem>>, vector<16x128xf32>,
    } else {
    }
    return
  }
  func.func @transform_0(%arg0: i32, %arg1: i32) -> (i32, i32) {
    %c0_i32 = arith.constant 0 : i32
    return %arg0, %arg1 : i32, i32
  }
  func.func @transform_1(%arg0: i32, %arg1: i32) -> (i32, i32) {
    %c0_i32 = arith.constant 0 : i32
    %c0_i32_0 = arith.constant 0 : i32
    %c0_i32_1 = arith.constant 0 : i32
    return %c0_i32, %c0_i32_0 : i32, i32
  }
  func.func @transform_2(%arg0: i32, %arg1: i32) -> (i32, i32) {
    %c0_i32 = arith.constant 0 : i32
    %c0_i32_0 = arith.constant 0 : i32
    %c0_i32_1 = arith.constant 0 : i32
    return %c0_i32, %c0_i32_0 : i32, i32
  }
  func.func @transform_3(%arg0: i32, %arg1: i32) -> (i32, i32) {
    %c0_i32 = arith.constant 0 : i32
    %c0_i32_0 = arith.constant 0 : i32
    %c0_i32_1 = arith.constant 0 : i32
    return %c0_i32, %c0_i32_0 : i32, i32
  }
  func.func @transform_4(%arg0: i32, %arg1: i32) -> (i32, i32) {
    %c0_i32 = arith.constant 0 : i32
    %c0_i32_0 = arith.constant 0 : i32
    %c0_i32_1 = arith.constant 0 : i32
    return %c0_i32, %c0_i32_0 : i32, i32
  }
  func.func @transform_5(%arg0: i32, %arg1: i32) -> (i32, i32) {
    %c0_i32 = arith.constant 0 : i32
    %c0_i32_0 = arith.constant 0 : i32
    return %arg0, %c0_i32 : i32, i32
  }
  func.func @transform_6(%arg0: i32, %arg1: i32) -> (i32, i32) {
    %c0_i32 = arith.constant 0 : i32
    %c0_i32_0 = arith.constant 0 : i32
    return %arg0, %c0_i32 : i32, i32
  }
  func.func @transform_7(%arg0: i32, %arg1: i32) -> (i32, i32) {
    %c0_i32 = arith.constant 0 : i32
    %c0_i32_0 = arith.constant 0 : i32
    return %arg0, %c0_i32 : i32, i32
  }
  func.func @transform_8(%arg0: i32, %arg1: i32) -> (i32, i32) {
    %c0_i32 = arith.constant 0 : i32
    %c0_i32_0 = arith.constant 0 : i32
    return %arg0, %c0_i32 : i32, i32
  }
}

</mosaic_0001>

<llo_original>
// kernel: tpu_custom_call.1
$region0: #{tpu_custom_call.1}
  #allocation0 [shape = 'u32[]', space=smem, size = 0x4, offset = 0x4, fixed_abs, tag = 'smem constant byte address 0x4 - core index']
  #allocation1 [shape = 'u32[144,128]{1,0:T(1,128)}', space=vmem, size = 0x12000, scoped, tag = 'internal scratch']
  #allocation2 [shape = 'f32[16,128]{1,0:T(8,128)}', space=vmem, size = 0x2000, scoped, tag = 'scratch operand']
  %s0 = inlined_call_operand.hbm [shape: bf16[16,128], index: 0, kind: input, shape index: {}]
  %s1 = inlined_call_operand.hbm [shape: bf16[128,128], index: 1, kind: input, shape index: {}]
  %s2 = inlined_call_operand.vmem [shape: f32[1,128], index: 2, kind: input, shape index: {}]
  %s3 = inlined_call_operand.hbm [shape: bf16[128,256], index: 3, kind: input, shape index: {}]
  %s4 = inlined_call_operand.vmem [shape: f32[1,256], index: 4, kind: input, shape index: {}]
  %s5 = inlined_call_operand.hbm [shape: f32[16,128], index: 5, kind: input, shape index: {}]
  %s6 = inlined_call_operand.hbm [shape: f32[16,128], index: 6, kind: output, shape index: {0}]
  %s7 = inlined_call_operand.hbm [shape: f32[16,128], index: 7, kind: output, shape index: {1}]
  %s8 = inlined_call_operand.hbm [shape: f32[16,128], index: 8, kind: output, shape index: {2}]
  %9 = xla_tuple %s6, %s7, %s8
  %s10 = sld [smem:[#allocation0]]
  $region74: #{tpu_custom_call.1} parent=0
    _
  %s12 = ssub.s32 1, %s10
  %s13 = scalar_select 0, %s12, %s10
  $region1: #{tpu_custom_call.1} parent=0
    #allocation3 [shape = 'u8[4096]{0}', space=vmem, size = 0x1000, scoped, tag = 'input window, operand 0, single buffered']
    #allocation4 [shape = 's32[1]{0}', space=sflag, size = 0x4, scoped, tag = 'scoped memory for tpu_custom_call.1']
    #allocation5 [shape = 's32[1]{0}', space=sflag, size = 0x4, scoped, tag = 'scoped memory for tpu_custom_call.1']
    #allocation6 [shape = 'u8[32768]{0}', space=vmem, size = 0x8000, scoped, tag = 'input window, operand 1, single buffered']
    #allocation7 [shape = 's32[1]{0}', space=sflag, size = 0x4, scoped, tag = 'scoped memory for tpu_custom_call.1']
    #allocation8 [shape = 'u8[65536]{0}', space=vmem, size = 0x10000, scoped, tag = 'input window, operand 3, single buffered']
    #allocation9 [shape = 'u8[8192]{0}', space=vmem, size = 0x2000, scoped, tag = 'input window, operand 5, single buffered']
    #allocation10 [shape = 's32[1]{0}', space=sflag, size = 0x4, scoped, tag = 'scoped memory for tpu_custom_call.1']
    #allocation11 [shape = 'u8[8192]{0}', space=vmem, size = 0x2000, scoped, tag = 'output window, operand 0, single buffered']
    #allocation12 [shape = 'u8[8192]{0}', space=vmem, size = 0x2000, scoped, tag = 'output window, operand 1, single buffered']
    #allocation13 [shape = 's32[1]{0}', space=sflag, size = 0x4, scoped, tag = 'scoped memory for tpu_custom_call.1']
    #allocation14 [shape = 'u8[8192]{0}', space=vmem, size = 0x2000, scoped, tag = 'output window, operand 2, single buffered']
    %14 = vsyncpa [#allocation4], 0
    %15 = vsyncpa [#allocation7], 0
    %16 = vsyncpa [#allocation10], 0
    %17 = vsyncpa [#allocation5], 0
    %18 = vsyncpa [#allocation13], 0
    // Predicated region
    $region2: #{tpu_custom_call.1} parent=1 // pred_check
      _
    $region3: #{tpu_custom_call.1} parent=1 // pred_check_branch
      %20 = sbr.rel (0) target = $region5
    $region4: #{tpu_custom_call.1} parent=1 // pred_region
      %s22 = ssub.s32 128, 128
      %23 = vsyncadd [#allocation4], %s22
      %s24 = sshll.u32 [#allocation3], 4
      %s25 = int_to_ptr.vmem [resolvable:$true] %s24
      %30 = dma.hbm_to_vmem [thread:$0]  %s0, 128, %s25, [#allocation4], 64, 64, 4
    $region5: #{tpu_custom_call.1} parent=1 // pred_fallthru
      _
    // Predicated region
    $region6: #{tpu_custom_call.1} parent=1 // pred_check
      _
    $region7: #{tpu_custom_call.1} parent=1 // pred_check_branch
      %32 = sbr.rel (0) target = $region9
    $region8: #{tpu_custom_call.1} parent=1 // pred_region
      %s34 = ssub.s32 1024, 1024
      %35 = vsyncadd [#allocation7], %s34
      %s36 = sshll.u32 [#allocation6], 4
      %s37 = int_to_ptr.vmem [resolvable:$true] %s36
      %42 = dma.hbm_to_vmem [thread:$0]  %s1, 1024, %s37, [#allocation7], 64, 64, 4
    $region9: #{tpu_custom_call.1} parent=1 // pred_fallthru
      _
    // Predicated region
    $region10: #{tpu_custom_call.1} parent=1 // pred_check
      _
    $region11: #{tpu_custom_call.1} parent=1 // pred_check_branch
      %44 = sbr.rel (0) target = $region13
    $region12: #{tpu_custom_call.1} parent=1 // pred_region
      _
    $region13: #{tpu_custom_call.1} parent=1 // pred_fallthru
      _
    // Predicated region
    $region14: #{tpu_custom_call.1} parent=1 // pred_check
      _
    $region15: #{tpu_custom_call.1} parent=1 // pred_check_branch
      %46 = sbr.rel (0) target = $region17
    $region16: #{tpu_custom_call.1} parent=1 // pred_region
      %s48 = ssub.s32 2048, 2048
      %49 = vsyncadd [#allocation7], %s48
      %s50 = sshll.u32 [#allocation8], 4
      %s51 = int_to_ptr.vmem [resolvable:$true] %s50
      %56 = dma.hbm_to_vmem [thread:$0]  %s3, 2048, %s51, [#allocation7], 128, 128, 8
    $region17: #{tpu_custom_call.1} parent=1 // pred_fallthru
      _
    // Predicated region
    $region18: #{tpu_custom_call.1} parent=1 // pred_check
      _
    $region19: #{tpu_custom_call.1} parent=1 // pred_check_branch
      %58 = sbr.rel (0) target = $region21
    $region20: #{tpu_custom_call.1} parent=1 // pred_region
      _
    $region21: #{tpu_custom_call.1} parent=1 // pred_fallthru
      _
    // Predicated region
    $region22: #{tpu_custom_call.1} parent=1 // pred_check
      _
    $region23: #{tpu_custom_call.1} parent=1 // pred_check_branch
      %60 = sbr.rel (0) target = $region25
    $region24: #{tpu_custom_call.1} parent=1 // pred_region
      %s62 = ssub.s32 256, 256
      %63 = vsyncadd [#allocation10], %s62
      %s64 = sshll.u32 [#allocation9], 4
      %s65 = int_to_ptr.vmem [resolvable:$true] %s64
      %70 = dma.hbm_to_vmem [thread:$0]  %s5, 256, %s65, [#allocation10], 128, 128, 8
    $region25: #{tpu_custom_call.1} parent=1 // pred_fallthru
      _
    // Predicated region
    $region26: #{tpu_custom_call.1} parent=1 // pred_check
      _
    $region27: #{tpu_custom_call.1} parent=1 // pred_check_branch
      %72 = sbr.rel (0) target = $region29
    $region28: #{tpu_custom_call.1} parent=1 // pred_region
      %73 = dma.done [#allocation4], 128
    $region29: #{tpu_custom_call.1} parent=1 // pred_fallthru
      _
    // Predicated region
    $region30: #{tpu_custom_call.1} parent=1 // pred_check
      _
    $region31: #{tpu_custom_call.1} parent=1 // pred_check_branch
      %75 = sbr.rel (0) target = $region33
    $region32: #{tpu_custom_call.1} parent=1 // pred_region
      %76 = dma.done [#allocation7], 1024
    $region33: #{tpu_custom_call.1} parent=1 // pred_fallthru
      _
    // Predicated region
    $region34: #{tpu_custom_call.1} parent=1 // pred_check
      _
    $region35: #{tpu_custom_call.1} parent=1 // pred_check_branch
      %78 = sbr.rel (0) target = $region37
    $region36: #{tpu_custom_call.1} parent=1 // pred_region
      %79 = dma.done [#allocation7], 2048
    $region37: #{tpu_custom_call.1} parent=1 // pred_fallthru
      _
    // Predicated region
    $region38: #{tpu_custom_call.1} parent=1 // pred_check
      _
    $region39: #{tpu_custom_call.1} parent=1 // pred_check_branch
      %81 = sbr.rel (0) target = $region41
    $region40: #{tpu_custom_call.1} parent=1 // pred_region
      %82 = dma.done [#allocation10], 256
    $region41: #{tpu_custom_call.1} parent=1 // pred_fallthru
      _
    %p84 = scmp.eq.s32.totalorder 0, 0
    // Predicated region
    $region42: #{tpu_custom_call.1} parent=1 // pred_check
      %p85 = pneg %p84
    $region43: #{tpu_custom_call.1} parent=1 // pred_check_branch
      %87 = sbr.rel (%p85) target = $region45
    $region44: #{tpu_custom_call.1} parent=1 // pred_region
      %88 = vst [vmem:[#allocation2] sm:$0xff] 0.0
      %89 = vst [vmem:[#allocation2 + $0x8] sm:$0xff] 0.0
    $region45: #{tpu_custom_call.1} parent=1 // pred_fallthru
      _
    %s90 = smul.u32 0, 128
    %v91 = vld [vmem:[#allocation2] sm:$0xff]
    %v92 = vld [vmem:[#allocation2 + $0x8] sm:$0xff]
    %v93 = vld [vmem:[#allocation3] sm:$0xf]
    %v94 = vld [vmem:[#allocation3 + $0x4] sm:$0xf]
    %s95 = sshra.s32 %s90, 3
    %s96 = sand.u32 %s90, 7
    %s97 = smul.addr %s95, 4
    %s98 = scalar_lea.vmem [#allocation6], %s97
    %v99 = vld [vmem:[%s98] sm:$0xf]
    %v100 = vld [vmem:[%s98 + $0x4] sm:$0xf]
    %v101 = vld [vmem:[%s98 + $0x8] sm:$0xf]
    %v102 = vld [vmem:[%s98 + $0xc] sm:$0xf]
    %v103 = vld [vmem:[%s98 + $0x10] sm:$0xf]
    %v104 = vld [vmem:[%s98 + $0x14] sm:$0xf]
    %v105 = vld [vmem:[%s98 + $0x18] sm:$0xf]
    %v106 = vld [vmem:[%s98 + $0x1c] sm:$0xf]
    %v107 = vld [vmem:[%s98 + $0x20] sm:$0xf]
    %v108 = vld [vmem:[%s98 + $0x24] sm:$0xf]
    %v109 = vld [vmem:[%s98 + $0x28] sm:$0xf]
    %v110 = vld [vmem:[%s98 + $0x2c] sm:$0xf]
    %v111 = vld [vmem:[%s98 + $0x30] sm:$0xf]
    %v112 = vld [vmem:[%s98 + $0x34] sm:$0xf]
    %v113 = vld [vmem:[%s98 + $0x38] sm:$0xf]
    %v114 = vld [vmem:[%s98 + $0x3c] sm:$0xf]
    %v117 = vunpack.c.l.b16 %v93
    %v118 = vunpack.c.l.b16 %v94
    %v119 = vpack.c.b16 %v118, %v117
    %v137 = vunpack.c.l.b16 %v99
    %v138 = vunpack.c.l.b16 %v100
    %v139 = vunpack.c.l.b16 %v101
    %v140 = vunpack.c.l.b16 %v102
    %v141 = vunpack.c.l.b16 %v103
    %v142 = vunpack.c.l.b16 %v104
    %v143 = vunpack.c.l.b16 %v105
    %v144 = vunpack.c.l.b16 %v106
    %v145 = vunpack.c.l.b16 %v107
    %v146 = vunpack.c.l.b16 %v108
    %v147 = vunpack.c.l.b16 %v109
    %v148 = vunpack.c.l.b16 %v110
    %v149 = vunpack.c.l.b16 %v111
    %v150 = vunpack.c.l.b16 %v112
    %v151 = vunpack.c.l.b16 %v113
    %v152 = vunpack.c.l.b16 %v114
    %v153 = vpack.c.b16 %v138, %v137
    %v154 = vpack.c.b16 %v140, %v139
    %v155 = vpack.c.b16 %v142, %v141
    %v156 = vpack.c.b16 %v144, %v143
    %v157 = vpack.c.b16 %v146, %v145
    %v158 = vpack.c.b16 %v148, %v147
    %v159 = vpack.c.b16 %v150, %v149
    %v160 = vpack.c.b16 %v152, %v151
    %169 = vmatprep.subr.bf16.mxu0 0
    %170 = vmatpush1.bf16.msra.mxu0 %v160
    %171 = vmatprep.subr.bf16.mxu0 0
    %172 = vmatpush1.bf16.msra.mxu0 %v159
    %173 = vmatprep.subr.bf16.mxu0 0
    %174 = vmatpush1.bf16.msra.mxu0 %v158
    %175 = vmatprep.subr.bf16.mxu0 0
    %176 = vmatpush1.bf16.msra.mxu0 %v157
    %177 = vmatprep.subr.bf16.mxu0 0
    %178 = vmatpush1.bf16.msra.mxu0 %v156
    %179 = vmatprep.subr.bf16.mxu0 0
    %180 = vmatpush1.bf16.msra.mxu0 %v155
    %181 = vmatprep.subr.bf16.mxu0 0
    %182 = vmatpush1.bf16.msra.mxu0 %v154
    %183 = vmatprep.subr.bf16.mxu0 0
    %184 = vmatpush1.bf16.msra.mxu0 %v153
    %185 = vmatprep.subr.bf16.mxu0 0
    %186 = vmatpush2.bf16.msra.mxu0 0
    %187 = vmatprep.subr.bf16.mxu0 0
    %188 = vmatpush2.bf16.msra.mxu0 0
    %189 = vmatprep.subr.bf16.mxu0 0
    %190 = vmatpush2.bf16.msra.mxu0 0
    %191 = vmatprep.subr.bf16.mxu0 0
    %192 = vmatpush2.bf16.msra.mxu0 0
    %193 = vmatprep.subr.bf16.mxu0 0
    %194 = vmatpush2.bf16.msra.mxu0 0
    %195 = vmatprep.subr.bf16.mxu0 0
    %196 = vmatpush2.bf16.msra.mxu0 0
    %197 = vmatprep.subr.bf16.mxu0 0
    %198 = vmatpush2.bf16.msra.mxu0 0
    %199 = vmatprep.subr.bf16.mxu0 0
    %200 = vmatpush2.bf16.msra.mxu0 0
    %201 = vmatprep.mubr.bf16.mxu0 0
    %202 = vmatmul.mubr.bf16.gmra.mxu0 %v119
    %v203 = vpop.f32.mrf.mxu0
    %v204 = vadd.f32 0.0, %v203
    %v205 = vpop.f32.mrf.mxu0
    %v206 = vpop.f32.mrf.mxu0
    %v207 = vadd.f32 0.0, %v206
    %v208 = vpop.f32.mrf.mxu0
    %209 = vdwg.mxu0
    %v210 = vadd.f32 %v91, %v204
    %v211 = vadd.f32 %v92, %v207
    %212 = vst [vmem:[#allocation2] sm:$0xff] %v210
    %213 = vst [vmem:[#allocation2 + $0x8] sm:$0xff] %v211
    // Predicated region
    $region46: #{tpu_custom_call.1} parent=1 // pred_check
      %p214 = pneg %p84
    $region47: #{tpu_custom_call.1} parent=1 // pred_check_branch
      %216 = sbr.rel (%p214) target = $region49
    $region48: #{tpu_custom_call.1} parent=1 // pred_region
      %v217 = vld [vmem:[#allocation2] sm:$0xff]
      %v218 = vld [vmem:[#allocation2 + $0x8] sm:$0xff]
      %v219 = vld [vmem:[%s2] sm:$0x1]
      %v221 = vlaneseq
      %v222 = vshrl.u32 %v221, 7
      %v223 = vsub.s32 0, %v222
      %v224 = vrot.slane %v219, %v223
      %v226 = vadd.f32 %v217, %v224
      %v227 = vadd.f32 %v218, %v224
      %v228 = vmax.f32 %v226, 0.0
      %v229 = vmax.f32 %v227, 0.0
      %v230 = vpack.c.bf16 %v229, %v228
      %v231 = vld [vmem:[#allocation8] sm:$0xff]
      %v232 = vld [vmem:[#allocation8 + $0x8] sm:$0xff]
      %v233 = vld [vmem:[#allocation8 + $0x10] sm:$0xff]
      %v234 = vld [vmem:[#allocation8 + $0x18] sm:$0xff]
      %v235 = vld [vmem:[#allocation8 + $0x20] sm:$0xff]
      %v236 = vld [vmem:[#allocation8 + $0x28] sm:$0xff]
      %v237 = vld [vmem:[#allocation8 + $0x30] sm:$0xff]
      %v238 = vld [vmem:[#allocation8 + $0x38] sm:$0xff]
      %v239 = vld [vmem:[#allocation8 + $0x40] sm:$0xff]
      %v240 = vld [vmem:[#allocation8 + $0x48] sm:$0xff]
      %v241 = vld [vmem:[#allocation8 + $0x50] sm:$0xff]
      %v242 = vld [vmem:[#allocation8 + $0x58] sm:$0xff]
      %v243 = vld [vmem:[#allocation8 + $0x60] sm:$0xff]
      %v244 = vld [vmem:[#allocation8 + $0x68] sm:$0xff]
      %v245 = vld [vmem:[#allocation8 + $0x70] sm:$0xff]
      %v246 = vld [vmem:[#allocation8 + $0x78] sm:$0xff]
      %v247 = vld [vmem:[%s4] sm:$0x3]
      %v249 = vlaneseq
      %v250 = vshrl.u32 %v249, 7
      %v251 = vsub.s32 0, %v250
      %v252 = vrot.slane %v247, %v251
      %v253 = vlaneseq
      %v254 = vshrl.u32 %v253, 7
      %v255 = vsub.s32 1, %v254
      %v256 = vrot.slane %v247, %v255
      %v275 = vunpack.c.l.b16 %v231
      %v276 = vunpack.c.h.b16 %v231
      %v277 = vunpack.c.l.b16 %v232
      %v278 = vunpack.c.h.b16 %v232
      %v279 = vunpack.c.l.b16 %v233
      %v280 = vunpack.c.h.b16 %v233
      %v281 = vunpack.c.l.b16 %v234
      %v282 = vunpack.c.h.b16 %v234
      %v283 = vunpack.c.l.b16 %v235
      %v284 = vunpack.c.h.b16 %v235
      %v285 = vunpack.c.l.b16 %v236
      %v286 = vunpack.c.h.b16 %v236
      %v287 = vunpack.c.l.b16 %v237
      %v288 = vunpack.c.h.b16 %v237
      %v289 = vunpack.c.l.b16 %v238
      %v290 = vunpack.c.h.b16 %v238
      %v291 = vunpack.c.l.b16 %v239
      %v292 = vunpack.c.h.b16 %v239
      %v293 = vunpack.c.l.b16 %v240
      %v294 = vunpack.c.h.b16 %v240
      %v295 = vunpack.c.l.b16 %v241
      %v296 = vunpack.c.h.b16 %v241
      %v297 = vunpack.c.l.b16 %v242
      %v298 = vunpack.c.h.b16 %v242
      %v299 = vunpack.c.l.b16 %v243
      %v300 = vunpack.c.h.b16 %v243
      %v301 = vunpack.c.l.b16 %v244
      %v302 = vunpack.c.h.b16 %v244
      %v303 = vunpack.c.l.b16 %v245
      %v304 = vunpack.c.h.b16 %v245
      %v305 = vunpack.c.l.b16 %v246
      %v306 = vunpack.c.h.b16 %v246
      %v307 = vpack.c.b16 %v277, %v275
      %v308 = vpack.c.b16 %v278, %v276
      %v309 = vpack.c.b16 %v281, %v279
      %v310 = vpack.c.b16 %v282, %v280
      %v311 = vpack.c.b16 %v285, %v283
      %v312 = vpack.c.b16 %v286, %v284
      %v313 = vpack.c.b16 %v289, %v287
      %v314 = vpack.c.b16 %v290, %v288
      %v315 = vpack.c.b16 %v293, %v291
      %v316 = vpack.c.b16 %v294, %v292
      %v317 = vpack.c.b16 %v297, %v295
      %v318 = vpack.c.b16 %v298, %v296
      %v319 = vpack.c.b16 %v301, %v299
      %v320 = vpack.c.b16 %v302, %v300
      %v321 = vpack.c.b16 %v305, %v303
      %v322 = vpack.c.b16 %v306, %v304
      %339 = vmatprep.subr.bf16.mxu0 %v322
      %340 = vmatpush1.bf16.msra.mxu0 %v321
      %341 = vmatprep.subr.bf16.mxu0 %v320
      %342 = vmatpush1.bf16.msra.mxu0 %v319
      %343 = vmatprep.subr.bf16.mxu0 %v318
      %344 = vmatpush1.bf16.msra.mxu0 %v317
      %345 = vmatprep.subr.bf16.mxu0 %v316
      %346 = vmatpush1.bf16.msra.mxu0 %v315
      %347 = vmatprep.subr.bf16.mxu0 %v314
      %348 = vmatpush1.bf16.msra.mxu0 %v313
      %349 = vmatprep.subr.bf16.mxu0 %v312
      %350 = vmatpush1.bf16.msra.mxu0 %v311
      %351 = vmatprep.subr.bf16.mxu0 %v310
      %352 = vmatpush1.bf16.msra.mxu0 %v309
      %353 = vmatprep.subr.bf16.mxu0 %v308
      %354 = vmatpush1.bf16.msra.mxu0 %v307
      %355 = vmatprep.subr.bf16.mxu0 0
      %356 = vmatpush2.bf16.msra.mxu0 0
      %357 = vmatprep.subr.bf16.mxu0 0
      %358 = vmatpush2.bf16.msra.mxu0 0
      %359 = vmatprep.subr.bf16.mxu0 0
      %360 = vmatpush2.bf16.msra.mxu0 0
      %361 = vmatprep.subr.bf16.mxu0 0
      %362 = vmatpush2.bf16.msra.mxu0 0
      %363 = vmatprep.subr.bf16.mxu0 0
      %364 = vmatpush2.bf16.msra.mxu0 0
      %365 = vmatprep.subr.bf16.mxu0 0
      %366 = vmatpush2.bf16.msra.mxu0 0
      %367 = vmatprep.subr.bf16.mxu0 0
      %368 = vmatpush2.bf16.msra.mxu0 0
      %369 = vmatprep.subr.bf16.mxu0 0
      %370 = vmatpush2.bf16.msra.mxu0 0
      %371 = vmatprep.mubr.bf16.mxu0 0
      %372 = vmatmul.mubr.bf16.gmra.mxu0 %v230
      %v373 = vpop.f32.mrf.mxu0
      %v374 = vadd.f32 %v252, %v373
      %v375 = vpop.f32.mrf.mxu0
      %v376 = vadd.f32 %v256, %v375
      %v377 = vpop.f32.mrf.mxu0
      %v378 = vadd.f32 %v252, %v377
      %v379 = vpop.f32.mrf.mxu0
      %v380 = vadd.f32 %v256, %v379
      %381 = vdwg.mxu0
      %v382 = vmul.f32 %v376, 1.442695
      %v383 = vpow.pop %v382
      %v384 = vmul.f32 %v380, 1.442695
      %v385 = vpow.pop %v384
      %v386 = vadd.f32 %v383, 0.0001
      %v387 = vadd.f32 %v385, 0.0001
      %388 = vst [vmem:[#allocation11] sm:$0xff] %v374
      %389 = vst [vmem:[#allocation11 + $0x8] sm:$0xff] %v378
      %390 = vst [vmem:[#allocation12] sm:$0xff] %v386
      %391 = vst [vmem:[#allocation12 + $0x8] sm:$0xff] %v387
      %v392 = vrsqrt.pop %v386
      %v393 = vmul.f32 %v386, %v392
      %vm394 = vcmp.eq.f32.partialorder %v386, inf
      %v395 = vsel %vm394, %v386, %v393
      %vm396 = vcmp.eq.f32.partialorder %v386, 0.0
      %v397 = vand.u32 %v386, 2147483648
      %v398 = vsel %vm396, %v397, %v395
      %v399 = vrsqrt.pop %v387
      %v400 = vmul.f32 %v387, %v399
      %vm401 = vcmp.eq.f32.partialorder %v387, inf
      %v402 = vsel %vm401, %v387, %v400
      %vm403 = vcmp.eq.f32.partialorder %v387, 0.0
      %v404 = vand.u32 %v387, 2147483648
      %v405 = vsel %vm403, %v404, %v402
      %v406 = vld [vmem:[#allocation9] sm:$0xff]
      %v407 = vld [vmem:[#allocation9 + $0x8] sm:$0xff]
      %v408 = vmul.f32 %v398, %v406
      %v409 = vmul.f32 %v405, %v407
      %v410 = vadd.f32 %v374, %v408
      %v411 = vadd.f32 %v378, %v409
      %412 = vst [vmem:[#allocation14] sm:$0xff] %v410
      %413 = vst [vmem:[#allocation14 + $0x8] sm:$0xff] %v411
    $region49: #{tpu_custom_call.1} parent=1 // pred_fallthru
      _
    // Predicated region
    $region50: #{tpu_custom_call.1} parent=1 // pred_check
      _
    $region51: #{tpu_custom_call.1} parent=1 // pred_check_branch
      %415 = sbr.rel (0) target = $region53
    $region52: #{tpu_custom_call.1} parent=1 // pred_region
      %s417 = ssub.s32 256, 256
      %418 = vsyncadd [#allocation5], %s417
      %s419 = sshll.u32 [#allocation11], 4
      %s420 = int_to_ptr.vmem [resolvable:$true] %s419
      %425 = dma.vmem_to_hbm [thread:$0]  %s420, 256, %s6, [#allocation5], 128, 128, 8
    $region53: #{tpu_custom_call.1} parent=1 // pred_fallthru
      _
    // Predicated region
    $region54: #{tpu_custom_call.1} parent=1 // pred_check
      _
    $region55: #{tpu_custom_call.1} parent=1 // pred_check_branch
      %427 = sbr.rel (0) target = $region57
    $region56: #{tpu_custom_call.1} parent=1 // pred_region
      %s429 = ssub.s32 256, 256
      %430 = vsyncadd [#allocation13], %s429
      %s431 = sshll.u32 [#allocation12], 4
      %s432 = int_to_ptr.vmem [resolvable:$true] %s431
      %437 = dma.vmem_to_hbm [thread:$0]  %s432, 256, %s7, [#allocation13], 128, 128, 8
    $region57: #{tpu_custom_call.1} parent=1 // pred_fallthru
      _
    // Predicated region
    $region58: #{tpu_custom_call.1} parent=1 // pred_check
      _
    $region59: #{tpu_custom_call.1} parent=1 // pred_check_branch
      %439 = sbr.rel (0) target = $region61
    $region60: #{tpu_custom_call.1} parent=1 // pred_region
      %s441 = ssub.s32 256, 256
      %442 = vsyncadd [#allocation13], %s441
      %s443 = sshll.u32 [#allocation14], 4
      %s444 = int_to_ptr.vmem [resolvable:$true] %s443
      %449 = dma.vmem_to_hbm [thread:$0]  %s444, 256, %s8, [#allocation13], 128, 128, 8
    $region61: #{tpu_custom_call.1} parent=1 // pred_fallthru
      _
    // Predicated region
    $region62: #{tpu_custom_call.1} parent=1 // pred_check
      _
    $region63: #{tpu_custom_call.1} parent=1 // pred_check_branch
      %451 = sbr.rel (0) target = $region65
    $region64: #{tpu_custom_call.1} parent=1 // pred_region
      %452 = dma.done [#allocation5], 256
    $region65: #{tpu_custom_call.1} parent=1 // pred_fallthru
      _
    // Predicated region
    $region66: #{tpu_custom_call.1} parent=1 // pred_check
      _
    $region67: #{tpu_custom_call.1} parent=1 // pred_check_branch
      %454 = sbr.rel (0) target = $region69
    $region68: #{tpu_custom_call.1} parent=1 // pred_region
      %455 = dma.done [#allocation13], 256
    $region69: #{tpu_custom_call.1} parent=1 // pred_fallthru
      _
    // Predicated region
    $region70: #{tpu_custom_call.1} parent=1 // pred_check
      _
    $region71: #{tpu_custom_call.1} parent=1 // pred_check_branch
      %457 = sbr.rel (0) target = $region73
    $region72: #{tpu_custom_call.1} parent=1 // pred_region
      %458 = dma.done [#allocation13], 256
    $region73: #{tpu_custom_call.1} parent=1 // pred_fallthru
      _
    %459 = vsyncpa [#allocation4], 1
    %460 = vsyncpa [#allocation7], 1
    %461 = vsyncpa [#allocation10], 1
    %462 = vsyncpa [#allocation5], 1
    %463 = vsyncpa [#allocation13], 1

</llo_original>
